<compile_context>
chip_gen: v7x
topology: tpu7x:2x2x1
jax: 0.10.0
libtpu: 0.0.40
codegen_flags: <defaults>
</compile_context>

<pallas_src>
import functools

import jax
import jax.numpy as jnp
from jax import lax
from jax.experimental import pallas as pl
from jax.experimental.pallas import tpu as pltpu

_INF = 1.0e8          # matches self.INF in the PyTorch module (reference only)
_NEG_BIG = -1.0e30    # stand-in for -inf when masking the row max


def _ntxent_half_kernel(zi_ref, zj_ref, lab_ref, out_ref, *,
                        inv_temperature, gamma, matmul_bf16):
    """Loss contribution of one row-half of sim_Z (one grid point)."""
    n = zi_ref.shape[0]
    g = pl.program_id(0)
    is_first = g == 0                       # rows come from z_i (else z_j)

    # ---- row-wise L2 normalization (F.normalize, p=2, eps=1e-12) ------------
    zi = zi_ref[...]
    zj = zj_ref[...]
    zi = zi * lax.rsqrt(jnp.maximum(jnp.sum(zi * zi, -1, keepdims=True), 1e-24))
    zj = zj * lax.rsqrt(jnp.maximum(jnp.sum(zj * zj, -1, keepdims=True), 1e-24))
    zr = jnp.where(is_first, zi, zj)        # this half's row vectors

    if matmul_bf16:
        zi_m = zi.astype(jnp.bfloat16)
        zj_m = zj.astype(jnp.bfloat16)
        zr_m = zr.astype(jnp.bfloat16)
    else:
        zi_m, zj_m, zr_m = zi, zj, zr

    def gram_t(a, b):                       # a @ b.T, f32 accumulation (MXU)
        return lax.dot_general(a, b, (((1,), (1,)), ((), ())),
                               preferred_element_type=jnp.float32)

    # column block 0 (z_i columns) / block 1 (z_j columns) of sim_Z, this half
    sim_a = gram_t(zr_m, zi_m) * inv_temperature          # (N, N)
    sim_b = gram_t(zr_m, zj_m) * inv_temperature          # (N, N)

    # The global diagonal of sim_Z lands in block a for the z_i rows and in
    # block b for the z_j rows.  It is excluded (never -INF-materialized).
    row = lax.broadcasted_iota(jnp.int32, (n, n), 0)
    col = lax.broadcasted_iota(jnp.int32, (n, n), 1)
    blk_diag = row == col
    excl_a = jnp.logical_and(blk_diag, is_first)
    excl_b = jnp.logical_and(blk_diag, jnp.logical_not(is_first))

    # ---- row log-softmax over all 2N columns (diag excluded) ---------------
    m = jnp.maximum(
        jnp.max(jnp.where(excl_a, _NEG_BIG, sim_a), axis=1, keepdims=True),
        jnp.max(jnp.where(excl_b, _NEG_BIG, sim_b), axis=1, keepdims=True))
    p_a = jnp.where(excl_a, 0.0, jnp.exp(sim_a - m))
    p_b = jnp.where(excl_b, 0.0, jnp.exp(sim_b - m))
    lse = m + jnp.log(jnp.sum(p_a, axis=1, keepdims=True) +
                      jnp.sum(p_b, axis=1, keepdims=True))

    # ---- RBF label-kernel weights at NxN (f32) -------------------------------
    # squared norms are read off the gram diagonal (one mask + sublane/lane
    # reduce; no M=1 matmul, no transpose), so d2's diagonal is exactly 0 and
    # K's diagonal exactly 1, matching the reference.
    lab = lab_ref[...]
    gram = gram_t(lab, lab)                                 # (N, N) f32
    gdiag = jnp.where(blk_diag, gram, 0.0)
    sq_col = jnp.sum(gdiag, axis=1, keepdims=True)          # (N, 1) ||l_a||^2
    sq_row = jnp.sum(gdiag, axis=0, keepdims=True)          # (1, N) ||l_b||^2
    d2 = jnp.maximum(sq_col + sq_row - 2.0 * gram, 0.0)
    k_rbf = jnp.exp(-gamma * d2)
    # numpy quirk of the reference: weights /= weights.sum(axis=1) broadcasts
    # over the LAST axis -> column j is divided by (masked) rowsum[j]; with
    # duplicated labels that is 2*colsum(K)[j%N] - 1.
    denom = 2.0 * jnp.sum(k_rbf, axis=0, keepdims=True) - 1.0   # (1, N) >= 1
    kn = k_rbf * (1.0 / denom)              # exact reciprocal of a tiny vector

    # ---- fused weighted reduction (no log_sim / 2Nx2N weight temporaries) ----
    ls_a = jnp.where(excl_a, 0.0, sim_a - lse)
    ls_b = jnp.where(excl_b, 0.0, sim_b - lse)
    partial = jnp.sum(kn * (ls_a + ls_b))

    out_ref[...] = jnp.zeros(out_ref.shape, jnp.float32) + (-1.0 / n) * partial


def _round_up(x, m):
    return (x + m - 1) // m * m


def _vmem_capacity_bytes():
    cap = 64 * 1024 * 1024                      # conservative fallback (= v7x)
    try:
        cap = int(getattr(pltpu.get_tpu_info(), "vmem_capacity_bytes", cap))
    except Exception:
        pass
    return cap


def generalized_supervised_ntxent_loss(z_i, z_j, labels, temperature=0.1,
                                       sigma=1.0, matmul_bf16=True):
    """Forward pass of GeneralizedSupervisedNTXenLoss ('rbf' kernel)."""
    n, d = z_i.shape
    lab = jnp.reshape(labels, (n, -1)).astype(jnp.float32)
    l = lab.shape[-1]
    z_i = z_i.astype(jnp.float32)
    z_j = z_j.astype(jnp.float32)
    gamma = 1.0 / (2.0 * sigma ** 2)

    # --- VMEM sizing: per-grid-step working set, tile-padded -----------------
    np8, np128 = _round_up(n, 8), _round_up(n, 128)
    dpad, lpad = _round_up(d, 128), _round_up(l, 128)
    nn_bytes = np8 * np128 * 4
    live = (4 * np8 * (2 * dpad + lpad)         # f32 inputs resident in VMEM
            + 2 * np8 * 2 * dpad                # bf16 matmul operands
            + 12 * nn_bytes                     # ~live NxN f32 temporaries
            + 2 * 8 * 128 * 4)                  # output tiles
    ceiling = _vmem_capacity_bytes() * 3 // 4   # never request 100% of physical
    if live > ceiling:
        # TODO(synk): row-tiled grid ((tq, N) blocks, online log-softmax,
        # two-pass column denominators) for batches whose NxN working set
        # exceeds one core's VMEM.
        raise ValueError(
            f"batch N={n}: ~{live} B of VMEM per step exceeds the {ceiling} B "
            "budget of this TPU generation; tiled fallback not implemented")
    vmem_limit = int(min(ceiling, max(32 * 1024 * 1024, 2 * live)))

    cost = pl.CostEstimate(
        flops=8 * n * n * d + 4 * n * n * l + 40 * n * n,
        transcendentals=6 * n * n,
        bytes_accessed=8 * (2 * n * d + n * l) + 2 * 8 * 128 * 4)

    kernel = functools.partial(_ntxent_half_kernel,
                               inv_temperature=1.0 / temperature,
                               gamma=gamma, matmul_bf16=matmul_bf16)

    partials = pl.pallas_call(
        kernel,
        grid=(2,),
        out_shape=jax.ShapeDtypeStruct((2, 8, 128), jnp.float32),
        in_specs=[pl.BlockSpec((n, d), lambda g: (0, 0)),
                  pl.BlockSpec((n, d), lambda g: (0, 0)),
                  pl.BlockSpec((n, l), lambda g: (0, 0))],
        out_specs=pl.BlockSpec((1, 8, 128), lambda g: (g, 0, 0)),
        compiler_params=pltpu.CompilerParams(
            dimension_semantics=("parallel",),
            vmem_limit_bytes=vmem_limit),
        cost_estimate=cost,
    )(z_i, z_j, lab)
    return partials[0, 0, 0] + partials[1, 0, 0]


def _reference_loss(z_i, z_j, labels, temperature=0.1, sigma=1.0):
    """Pure-JAX transcription of the PyTorch forward, for verification."""
    n = z_i.shape[0]
    zi = z_i / jnp.maximum(jnp.linalg.norm(z_i, axis=-1, keepdims=True), 1e-12)
    zj = z_j / jnp.maximum(jnp.linalg.norm(z_j, axis=-1, keepdims=True), 1e-12)
    sim_zii = zi @ zi.T / temperature - _INF * jnp.eye(n)
    sim_zjj = zj @ zj.T / temperature - _INF * jnp.eye(n)
    sim_zij = zi @ zj.T / temperature
    all_labels = jnp.tile(jnp.reshape(labels, (n, -1)), (2, 1))
    gamma = 1.0 / (2.0 * sigma ** 2)
    d2 = jnp.sum((all_labels[:, None, :] - all_labels[None, :, :]) ** 2, -1)
    w = jnp.exp(-gamma * d2) * (1.0 - jnp.eye(2 * n))
    w = w / jnp.sum(w, axis=1)            # numpy-style broadcast over last axis
    sim_z = jnp.concatenate(
        [jnp.concatenate([sim_zii, sim_zij], axis=1),
         jnp.concatenate([sim_zij.T, sim_zjj], axis=1)], axis=0)
    log_sim_z = jax.nn.log_softmax(sim_z, axis=1)
    return (-1.0 / n) * jnp.sum(w * log_sim_z)


if __name__ == "__main__":
    key = jax.random.PRNGKey(0)
    k1, k2, k3 = jax.random.split(key, 3)
    N, D, L = 8, 32, 4
    z_i = jax.random.normal(k1, (N, D), dtype=jnp.float32)
    z_j = jax.random.normal(k2, (N, D), dtype=jnp.float32)
    labels = jax.random.normal(k3, (N, L), dtype=jnp.float32)

    ref = _reference_loss(z_i, z_j, labels)

    # default path: bf16 similarity matmuls (MXU-native)
    loss_bf16 = generalized_supervised_ntxent_loss(z_i, z_j, labels)
    jax.block_until_ready(loss_bf16)
    assert jnp.allclose(loss_bf16, ref, rtol=3e-2, atol=3e-2), (loss_bf16, ref)

    # full-f32 path for a tighter accuracy check
    loss_f32 = generalized_supervised_ntxent_loss(z_i, z_j, labels,
                                                  matmul_bf16=False)
    jax.block_until_ready(loss_f32)
    assert jnp.allclose(loss_f32, ref, rtol=1e-3, atol=1e-3), (loss_f32, ref)

    print("KERNEL_OK")
</pallas_src>

<mosaic_0001>
module attributes {stable_mosaic.version = 11 : i64} {
  func.func @_ntxent_half_kernel(%arg0: i32, %arg1: memref<8x32xf32, #tpu.memory_space<vmem>>, %arg2: memref<8x32xf32, #tpu.memory_space<vmem>>, %arg3: memref<8x4xf32, #tpu.memory_space<vmem>>, %arg4: memref<1x8x128xf32, #tpu.memory_space<vmem>>) attributes {dimension_semantics = [#tpu.dimension_semantics<parallel>], iteration_bounds = array<i64: 2>, scalar_prefetch = 0 : i64, scratch_operands = 0 : i64, tpu.core_type = #tpu.core_type<tc>, window_params = [{pipeline_mode = #tpu.pipeline_mode<synchronous>, transform_indices = @transform_0, window_bounds = array<i64: 8, 32>}, {pipeline_mode = #tpu.pipeline_mode<synchronous>, transform_indices = @transform_1, window_bounds = array<i64: 8, 32>}, {pipeline_mode = #tpu.pipeline_mode<synchronous>, transform_indices = @transform_2, window_bounds = array<i64: 8, 4>}, {transform_indices = @transform_3, window_bounds = array<i64: 1, 8, 128>}]} {
    %c0_i32 = arith.constant 0 : i32
    %0 = arith.cmpi eq, %arg0, %c0_i32 : i32
    %c0 = arith.constant 0 : index
    %c0_0 = arith.constant 0 : index
    %1 = vector.load %arg1[%c0, %c0_0] : memref<8x32xf32, #tpu.memory_space<vmem>>, vector<8x32xf32>
    %c0_1 = arith.constant 0 : index
    %c0_2 = arith.constant 0 : index
    %2 = vector.load %arg2[%c0_1, %c0_2] : memref<8x32xf32, #tpu.memory_space<vmem>>, vector<8x32xf32>
    %3 = arith.mulf %1, %1 : vector<8x32xf32>
    %cst = arith.constant dense<0.000000e+00> : vector<8xf32>
    %4 = vector.multi_reduction <add>, %3, %cst [1] : vector<8x32xf32> to vector<8xf32>
    %5 = vector.shape_cast %4 : vector<8xf32> to vector<8x1xf32>
    %cst_3 = arith.constant 1.000000e-24 : f32
    %6 = vector.broadcast %cst_3 : f32 to vector<8x1xf32>
    %7 = arith.maximumf %5, %6 : vector<8x1xf32>
    %8 = math.rsqrt %7 : vector<8x1xf32>
    %9 = vector.broadcast %8 : vector<8x1xf32> to vector<8x32xf32>
    %10 = arith.mulf %1, %9 : vector<8x32xf32>
    %11 = arith.mulf %2, %2 : vector<8x32xf32>
    %cst_4 = arith.constant dense<0.000000e+00> : vector<8xf32>
    %12 = vector.multi_reduction <add>, %11, %cst_4 [1] : vector<8x32xf32> to vector<8xf32>
    %13 = vector.shape_cast %12 : vector<8xf32> to vector<8x1xf32>
    %cst_5 = arith.constant 1.000000e-24 : f32
    %14 = vector.broadcast %cst_5 : f32 to vector<8x1xf32>
    %15 = arith.maximumf %13, %14 : vector<8x1xf32>
    %16 = math.rsqrt %15 : vector<8x1xf32>
    %17 = vector.broadcast %16 : vector<8x1xf32> to vector<8x32xf32>
    %18 = arith.mulf %2, %17 : vector<8x32xf32>
    %19 = arith.select %0, %10, %18 : vector<8x32xf32>
    %20 = arith.truncf %10 : vector<8x32xf32> to vector<8x32xbf16>
    %21 = arith.truncf %18 : vector<8x32xf32> to vector<8x32xbf16>
    %22 = arith.truncf %19 : vector<8x32xf32> to vector<8x32xbf16>
    %cst_6 = arith.constant dense<0.000000e+00> : vector<8x8xf32>
    %23 = tpu.matmul %22, %20, %cst_6 {dimension_numbers = #tpu.dot_dimension_numbers<[1], [1], [0], [0], [0, 0, 1, 0], [], []>} : vector<8x32xbf16>, vector<8x32xbf16>, vector<8x8xf32> -> vector<8x8xf32>
    %cst_7 = arith.constant 1.000000e+01 : f32
    %24 = vector.broadcast %cst_7 : f32 to vector<8x8xf32>
    %25 = arith.mulf %23, %24 : vector<8x8xf32>
    %cst_8 = arith.constant dense<0.000000e+00> : vector<8x8xf32>
    %26 = tpu.matmul %22, %21, %cst_8 {dimension_numbers = #tpu.dot_dimension_numbers<[1], [1], [0], [0], [0, 0, 1, 0], [], []>} : vector<8x32xbf16>, vector<8x32xbf16>, vector<8x8xf32> -> vector<8x8xf32>
    %cst_9 = arith.constant 1.000000e+01 : f32
    %27 = vector.broadcast %cst_9 : f32 to vector<8x8xf32>
    %28 = arith.mulf %26, %27 : vector<8x8xf32>
    %29 = tpu.iota {dimensions = array<i32: 0>} : vector<8x8xi32>
    %30 = tpu.iota {dimensions = array<i32: 1>} : vector<8x8xi32>
    %31 = arith.cmpi eq, %29, %30 : vector<8x8xi32>
    %32 = vector.broadcast %0 : i1 to vector<8x8xi1>
    %33 = arith.andi %31, %32 : vector<8x8xi1>
    %true = arith.constant true
    %34 = arith.xori %0, %true : i1
    %35 = vector.broadcast %34 : i1 to vector<8x8xi1>
    %36 = arith.andi %31, %35 : vector<8x8xi1>
    %cst_10 = arith.constant -1.000000e+30 : f32
    %37 = vector.broadcast %cst_10 : f32 to vector<8x8xf32>
    %38 = arith.select %33, %37, %25 : vector<8x8xi1>, vector<8x8xf32>
    %cst_11 = arith.constant dense<0xFF800000> : vector<8xf32>
    %39 = vector.multi_reduction <maximumf>, %38, %cst_11 [1] : vector<8x8xf32> to vector<8xf32>
    %40 = vector.shape_cast %39 : vector<8xf32> to vector<8x1xf32>
    %cst_12 = arith.constant -1.000000e+30 : f32
    %41 = vector.broadcast %cst_12 : f32 to vector<8x8xf32>
    %42 = arith.select %36, %41, %28 : vector<8x8xi1>, vector<8x8xf32>
    %cst_13 = arith.constant dense<0xFF800000> : vector<8xf32>
    %43 = vector.multi_reduction <maximumf>, %42, %cst_13 [1] : vector<8x8xf32> to vector<8xf32>
    %44 = vector.shape_cast %43 : vector<8xf32> to vector<8x1xf32>
    %45 = arith.maximumf %40, %44 : vector<8x1xf32>
    %46 = vector.broadcast %45 : vector<8x1xf32> to vector<8x8xf32>
    %47 = arith.subf %25, %46 : vector<8x8xf32>
    %48 = math.exp %47 : vector<8x8xf32>
    %cst_14 = arith.constant 0.000000e+00 : f32
    %49 = vector.broadcast %cst_14 : f32 to vector<8x8xf32>
    %50 = arith.select %33, %49, %48 : vector<8x8xi1>, vector<8x8xf32>
    %51 = vector.broadcast %45 : vector<8x1xf32> to vector<8x8xf32>
    %52 = arith.subf %28, %51 : vector<8x8xf32>
    %53 = math.exp %52 : vector<8x8xf32>
    %cst_15 = arith.constant 0.000000e+00 : f32
    %54 = vector.broadcast %cst_15 : f32 to vector<8x8xf32>
    %55 = arith.select %36, %54, %53 : vector<8x8xi1>, vector<8x8xf32>
    %cst_16 = arith.constant dense<0.000000e+00> : vector<8xf32>
    %56 = vector.multi_reduction <add>, %50, %cst_16 [1] : vector<8x8xf32> to vector<8xf32>
    %57 = vector.shape_cast %56 : vector<8xf32> to vector<8x1xf32>
    %cst_17 = arith.constant dense<0.000000e+00> : vector<8xf32>
    %58 = vector.multi_reduction <add>, %55, %cst_17 [1] : vector<8x8xf32> to vector<8xf32>
    %59 = vector.shape_cast %58 : vector<8xf32> to vector<8x1xf32>
    %60 = arith.addf %57, %59 : vector<8x1xf32>
    %61 = math.log %60 : vector<8x1xf32>
    %62 = arith.addf %45, %61 : vector<8x1xf32>
    %c0_18 = arith.constant 0 : index
    %c0_19 = arith.constant 0 : index
    %63 = vector.load %arg3[%c0_18, %c0_19] : memref<8x4xf32, #tpu.memory_space<vmem>>, vector<8x4xf32>
    %cst_20 = arith.constant dense<0.000000e+00> : vector<8x8xf32>
    %64 = tpu.matmul %63, %63, %cst_20 {dimension_numbers = #tpu.dot_dimension_numbers<[1], [1], [0], [0], [0, 0, 1, 0], [], []>} : vector<8x4xf32>, vector<8x4xf32>, vector<8x8xf32> -> vector<8x8xf32>
    %cst_21 = arith.constant 0.000000e+00 : f32
    %65 = vector.broadcast %cst_21 : f32 to vector<8x8xf32>
    %66 = arith.select %31, %64, %65 : vector<8x8xi1>, vector<8x8xf32>
    %cst_22 = arith.constant dense<0.000000e+00> : vector<8xf32>
    %67 = vector.multi_reduction <add>, %66, %cst_22 [1] : vector<8x8xf32> to vector<8xf32>
    %68 = vector.shape_cast %67 : vector<8xf32> to vector<8x1xf32>
    %cst_23 = arith.constant dense<0.000000e+00> : vector<8xf32>
    %69 = vector.multi_reduction <add>, %66, %cst_23 [0] : vector<8x8xf32> to vector<8xf32>
    %70 = vector.shape_cast %69 : vector<8xf32> to vector<1x8xf32>
    %71 = vector.broadcast %68 : vector<8x1xf32> to vector<8x8xf32>
    %72 = vector.broadcast %70 : vector<1x8xf32> to vector<8x8xf32>
    %73 = arith.addf %71, %72 : vector<8x8xf32>
    %cst_24 = arith.constant 2.000000e+00 : f32
    %74 = vector.broadcast %cst_24 : f32 to vector<8x8xf32>
    %75 = arith.mulf %74, %64 : vector<8x8xf32>
    %76 = arith.subf %73, %75 : vector<8x8xf32>
    %cst_25 = arith.constant 0.000000e+00 : f32
    %77 = vector.broadcast %cst_25 : f32 to vector<8x8xf32>
    %78 = arith.maximumf %76, %77 : vector<8x8xf32>
    %cst_26 = arith.constant -5.000000e-01 : f32
    %79 = vector.broadcast %cst_26 : f32 to vector<8x8xf32>
    %80 = arith.mulf %79, %78 : vector<8x8xf32>
    %81 = math.exp %80 : vector<8x8xf32>
    %cst_27 = arith.constant dense<0.000000e+00> : vector<8xf32>
    %82 = vector.multi_reduction <add>, %81, %cst_27 [0] : vector<8x8xf32> to vector<8xf32>
    %83 = vector.shape_cast %82 : vector<8xf32> to vector<1x8xf32>
    %cst_28 = arith.constant 2.000000e+00 : f32
    %84 = vector.broadcast %cst_28 : f32 to vector<1x8xf32>
    %85 = arith.mulf %84, %83 : vector<1x8xf32>
    %cst_29 = arith.constant 1.000000e+00 : f32
    %86 = vector.broadcast %cst_29 : f32 to vector<1x8xf32>
    %87 = arith.subf %85, %86 : vector<1x8xf32>
    %cst_30 = arith.constant 1.000000e+00 : f32
    %88 = vector.broadcast %cst_30 : f32 to vector<1x8xf32>
    %89 = arith.divf %88, %87 : vector<1x8xf32>
    %90 = vector.broadcast %89 : vector<1x8xf32> to vector<8x8xf32>
    %91 = arith.mulf %81, %90 : vector<8x8xf32>
    %92 = vector.broadcast %62 : vector<8x1xf32> to vector<8x8xf32>
    %93 = arith.subf %25, %92 : vector<8x8xf32>
    %cst_31 = arith.constant 0.000000e+00 : f32
    %94 = vector.broadcast %cst_31 : f32 to vector<8x8xf32>
    %95 = arith.select %33, %94, %93 : vector<8x8xi1>, vector<8x8xf32>
    %96 = vector.broadcast %62 : vector<8x1xf32> to vector<8x8xf32>
    %97 = arith.subf %28, %96 : vector<8x8xf32>
    %cst_32 = arith.constant 0.000000e+00 : f32
    %98 = vector.broadcast %cst_32 : f32 to vector<8x8xf32>
    %99 = arith.select %36, %98, %97 : vector<8x8xi1>, vector<8x8xf32>
    %100 = arith.addf %95, %99 : vector<8x8xf32>
    %101 = arith.mulf %91, %100 : vector<8x8xf32>
    %102 = vector.shape_cast %101 : vector<8x8xf32> to vector<1x8x8xf32>
    %cst_33 = arith.constant dense<0.000000e+00> : vector<1xf32>
    %103 = vector.multi_reduction <add>, %102, %cst_33 [1, 2] : vector<1x8x8xf32> to vector<1xf32>
    %104 = vector.shape_cast %103 : vector<1xf32> to vector<1x1x1xf32>
    %105 = vector.extract %104[0, 0, 0] : f32 from vector<1x1x1xf32>
    %cst_34 = arith.constant 0.000000e+00 : f32
    %106 = vector.broadcast %cst_34 : f32 to vector<1x8x128xf32>
    %cst_35 = arith.constant -1.250000e-01 : f32
    %107 = arith.mulf %cst_35, %105 : f32
    %108 = vector.broadcast %107 : f32 to vector<1x8x128xf32>
    %109 = arith.addf %106, %108 : vector<1x8x128xf32>
    %c0_36 = arith.constant 0 : index
    %c0_37 = arith.constant 0 : index
    %c0_38 = arith.constant 0 : index
    %110 = vector.load %arg4[%c0_36, %c0_37, %c0_38] : memref<1x8x128xf32, #tpu.memory_space<vmem>>, vector<1x8x128xf32>
    tpu.vector_store %arg4[%c0_36, %c0_37, %c0_38], %109 {strides = array<i32>} : memref<1x8x128xf32, #tpu.memory_space<vmem>>, vector<1x8x128xf32>,
    return
  }
  func.func @transform_0(%arg0: i32) -> (i32, i32) {
    %c0_i32 = arith.constant 0 : i32
    %c0_i32_0 = arith.constant 0 : i32
    %c0_i32_1 = arith.constant 0 : i32
    return %c0_i32, %c0_i32_0 : i32, i32
  }
  func.func @transform_1(%arg0: i32) -> (i32, i32) {
    %c0_i32 = arith.constant 0 : i32
    %c0_i32_0 = arith.constant 0 : i32
    %c0_i32_1 = arith.constant 0 : i32
    return %c0_i32, %c0_i32_0 : i32, i32
  }
  func.func @transform_2(%arg0: i32) -> (i32, i32) {
    %c0_i32 = arith.constant 0 : i32
    %c0_i32_0 = arith.constant 0 : i32
    %c0_i32_1 = arith.constant 0 : i32
    return %c0_i32, %c0_i32_0 : i32, i32
  }
  func.func @transform_3(%arg0: i32) -> (i32, i32, i32) {
    %c0_i32 = arith.constant 0 : i32
    %c0_i32_0 = arith.constant 0 : i32
    %c0_i32_1 = arith.constant 0 : i32
    return %arg0, %c0_i32, %c0_i32_0 : i32, i32, i32
  }
}

</mosaic_0001>

<llo_original>
// kernel: tpu_custom_call.1
$region0: #{tpu_custom_call.1}
  #allocation0 [shape = 'u32[]', space=smem, size = 0x4, offset = 0x4, fixed_abs, tag = 'smem constant byte address 0x4 - core index']
  #allocation1 [shape = 'u32[144,128]{1,0:T(1,128)}', space=vmem, size = 0x12000, scoped, tag = 'internal scratch']
  %s0 = inlined_call_operand.vmem [shape: f32[8,32], index: 0, kind: input, shape index: {}]
  %s1 = inlined_call_operand.hbm [shape: f32[8,32], index: 1, kind: input, shape index: {}]
  %s2 = inlined_call_operand.vmem [shape: f32[8,4], index: 2, kind: input, shape index: {}]
  %s3 = inlined_call_operand.hbm [shape: f32[2,8,128], index: 3, kind: output, shape index: {}]
  %s4 = sld [smem:[#allocation0]]
  $region49: #{tpu_custom_call.1} parent=0
    _
  %s6 = ssub.s32 1, %s4
  %s7 = scalar_select 0, %s6, %s4
  $region1: #{tpu_custom_call.1} parent=0
    #allocation2 [shape = 'u8[4096]{0}', space=vmem, size = 0x1000, scoped, tag = 'input window, operand 1, single buffered']
    #allocation3 [shape = 's32[2]{0}', space=sflag, size = 0x8, scoped, tag = 'scoped memory for tpu_custom_call.1']
    #allocation4 [shape = 's32[2]{0}', space=sflag, size = 0x8, scoped, tag = 'scoped memory for tpu_custom_call.1']
    #allocation5 [shape = 'u8[8192]{0}', space=vmem, size = 0x2000, scoped, tag = 'output window, operand 0']
    %8 = vsyncpa [#allocation3], 0
    %9 = vsyncpa [#allocation4], 0
    %s10 = scalar_lea.sflag [#allocation4], 1
    %11 = vsyncpa %s10, 0
    loop: start=0, step=1, limit=4
    $region2: #{tpu_custom_call.1} parent=1 // loop_pre_header
      _
    $region3: #{tpu_custom_call.1} parent=1 // loop_header
      %s13 = sphi 0, %s17
      %p14 = scmp.ge.s32.totalorder %s13, 4
      %s21 = sphi 0, %s21
      %s23 = sphi 0, %s21
      %s24 = sphi 0, %s23
      %s38 = sphi 0, %s24
      %s42 = sphi 0, %s42
      %s44 = sphi 0, %s42
      %s45 = sphi 0, %s44
      %s59 = sphi 0, %s45
      %s63 = sphi 0, %s63
      %s65 = sphi 0, %s63
      %s66 = sphi 0, %s65
      %s80 = sphi 0, %s66
      %s86 = sphi 0, %s88
      %s89 = sphi 0, %s86
      %s90 = sphi 0, %s89
      %s106 = sphi 0, %s90
    $region4: #{tpu_custom_call.1} parent=1 // loop_header_branch
      %16 = sbr.rel (%p14) target = $region8
    $region5: #{tpu_custom_call.1} parent=1 // loop_body
      %s18 = ssub.s32 %s13, 1
      %s19 = ssub.s32 %s13, 2
      %s20 = sadd.s32 %s13, 1
      %s22 = sadd.s32 %s21, 1
      %p25 = scmp.eq.s32.totalorder %s13, 1
      %p26 = scmp.ne.s32.totalorder %s21, %s23
      %p27 = scmp.eq.s32.totalorder %s13, 0
      %p28 = por %p26, %p27
      %p29 = scmp.ne.s32.totalorder %s21, %s23
      %p30 = scmp.eq.s32.totalorder %s18, 1
      %p31 = por %p29, %p30
      %p32 = scmp.ne.s32.totalorder %s23, %s24
      %p33 = scmp.eq.s32.totalorder %s18, 0
      %p34 = por %p32, %p33
      %p35 = scmp.ne.s32.totalorder %s23, %s24
      %p36 = scmp.eq.s32.totalorder %s19, 1
      %p37 = por %p35, %p36
      %p39 = scmp.ne.s32.totalorder %s24, %s38
      %p40 = scmp.eq.s32.totalorder %s19, 0
      %p41 = por %p39, %p40
      %s43 = sadd.s32 %s42, 1
      %p46 = scmp.eq.s32.totalorder %s13, 1
      %p47 = scmp.ne.s32.totalorder %s42, %s44
      %p48 = scmp.eq.s32.totalorder %s13, 0
      %p49 = por %p47, %p48
      %p50 = scmp.ne.s32.totalorder %s42, %s44
      %p51 = scmp.eq.s32.totalorder %s18, 1
      %p52 = por %p50, %p51
      %p53 = scmp.ne.s32.totalorder %s44, %s45
      %p54 = scmp.eq.s32.totalorder %s18, 0
      %p55 = por %p53, %p54
      %p56 = scmp.ne.s32.totalorder %s44, %s45
      %p57 = scmp.eq.s32.totalorder %s19, 1
      %p58 = por %p56, %p57
      %p60 = scmp.ne.s32.totalorder %s45, %s59
      %p61 = scmp.eq.s32.totalorder %s19, 0
      %p62 = por %p60, %p61
      %s64 = sadd.s32 %s63, 1
      %p67 = scmp.eq.s32.totalorder %s13, 1
      %p68 = scmp.ne.s32.totalorder %s63, %s65
      %p69 = scmp.eq.s32.totalorder %s13, 0
      %p70 = por %p68, %p69
      %p71 = scmp.ne.s32.totalorder %s63, %s65
      %p72 = scmp.eq.s32.totalorder %s18, 1
      %p73 = por %p71, %p72
      %p74 = scmp.ne.s32.totalorder %s65, %s66
      %p75 = scmp.eq.s32.totalorder %s18, 0
      %p76 = por %p74, %p75
      %p77 = scmp.ne.s32.totalorder %s65, %s66
      %p78 = scmp.eq.s32.totalorder %s19, 1
      %p79 = por %p77, %p78
      %p81 = scmp.ne.s32.totalorder %s66, %s80
      %p82 = scmp.eq.s32.totalorder %s19, 0
      %p83 = por %p81, %p82
      %s84 = ssub.s32 %s13, %s20
      %p85 = scmp.eq.s32.totalorder %s84, 0
      %s87 = sadd.s32 %s86, 1
      %s88 = scalar_select %p85, %s86, %s87
      %p91 = pneg %p85
      %p92 = scmp.eq.s32.totalorder %s13, 1
      %p93 = por %p91, %p92
      %p94 = scmp.ne.s32.totalorder %s86, %s89
      %p95 = scmp.eq.s32.totalorder %s13, 0
      %p96 = por %p94, %p95
      %p97 = scmp.ne.s32.totalorder %s86, %s89
      %p98 = scmp.eq.s32.totalorder %s18, 1
      %p99 = por %p97, %p98
      %p100 = scmp.ne.s32.totalorder %s89, %s90
      %p101 = scmp.eq.s32.totalorder %s18, 0
      %p102 = por %p100, %p101
      %p103 = scmp.ne.s32.totalorder %s89, %s90
      %p104 = scmp.eq.s32.totalorder %s19, 1
      %p105 = por %p103, %p104
      %p107 = scmp.ne.s32.totalorder %s90, %s106
      %p108 = scmp.eq.s32.totalorder %s19, 0
      %p109 = por %p107, %p108
      %p110 = scmp.le.s32.totalorder 1, %s13
      %p111 = scmp.lt.s32.totalorder %s13, 3
      %p112 = pnand %p110, %p111
      %p113 = pneg %p112
      // Predicated region
      $region9: #{tpu_custom_call.1} parent=5 // pred_check
        _
      $region10: #{tpu_custom_call.1} parent=5 // pred_check_branch
        %115 = sbr.rel (%p112) target = $region12
      $region11: #{tpu_custom_call.1} parent=5 // pred_region
        %s116 = ssub.s32 %s13, 1
        // Predicated region
        $region13: #{tpu_custom_call.1} parent=11 // pred_check
          %p117 = pneg %p34
        $region14: #{tpu_custom_call.1} parent=11 // pred_check_branch
          %119 = sbr.rel (%p117) target = $region16
        $region15: #{tpu_custom_call.1} parent=11 // pred_region
          _
        $region16: #{tpu_custom_call.1} parent=11 // pred_fallthru
          _
        // Predicated region
        $region17: #{tpu_custom_call.1} parent=11 // pred_check
          %p120 = pneg %p55
        $region18: #{tpu_custom_call.1} parent=11 // pred_check_branch
          %122 = sbr.rel (%p120) target = $region20
        $region19: #{tpu_custom_call.1} parent=11 // pred_region
          %s124 = ssub.s32 128, 128
          %125 = vsyncadd [#allocation3], %s124
          %s127 = sshll.u32 [#allocation2], 4
          %s128 = int_to_ptr.vmem [resolvable:$true] %s127
          %130 = dma.hbm_to_vmem [thread:$0]  %s1, 128, %s128, [#allocation3]
        $region20: #{tpu_custom_call.1} parent=11 // pred_fallthru
          _
        // Predicated region
        $region21: #{tpu_custom_call.1} parent=11 // pred_check
          %p131 = pneg %p76
        $region22: #{tpu_custom_call.1} parent=11 // pred_check_branch
          %133 = sbr.rel (%p131) target = $region24
        $region23: #{tpu_custom_call.1} parent=11 // pred_region
          _
        $region24: #{tpu_custom_call.1} parent=11 // pred_fallthru
          _
      $region12: #{tpu_custom_call.1} parent=5 // pred_fallthru
        _
      %p134 = scmp.lt.s32.totalorder %s13, 2
      // Predicated region
      $region25: #{tpu_custom_call.1} parent=5 // pred_check
        %p135 = pneg %p134
      $region26: #{tpu_custom_call.1} parent=5 // pred_check_branch
        %137 = sbr.rel (%p135) target = $region28
      $region27: #{tpu_custom_call.1} parent=5 // pred_region
        _
      $region28: #{tpu_custom_call.1} parent=5 // pred_fallthru
        _
      %p138 = scmp.le.s32.totalorder 1, %s13
      %p139 = scmp.lt.s32.totalorder %s13, 3
      %p140 = pnand %p138, %p139
      %p141 = pneg %p140
      // Predicated region
      $region29: #{tpu_custom_call.1} parent=5 // pred_check
        _
      $region30: #{tpu_custom_call.1} parent=5 // pred_check_branch
        %143 = sbr.rel (%p140) target = $region32
      $region31: #{tpu_custom_call.1} parent=5 // pred_region
        %s144 = ssub.s32 %s13, 1
        // Predicated region
        $region33: #{tpu_custom_call.1} parent=31 // pred_check
          %p145 = pneg %p55
        $region34: #{tpu_custom_call.1} parent=31 // pred_check_branch
          %147 = sbr.rel (%p145) target = $region36
        $region35: #{tpu_custom_call.1} parent=31 // pred_region
          %148 = dma.done [#allocation3], 128
        $region36: #{tpu_custom_call.1} parent=31 // pred_fallthru
          _
        %p149 = pneg %p34
        %p150 = pneg %p31
        %p151 = pneg %p55
        %p152 = pneg %p52
        %p153 = pneg %p76
        %p154 = pneg %p73
        %p155 = pneg %p102
        %p156 = pneg %p99
        %s157 = sand.u32 %s89, 1
        %s158 = scalar_lea.sflag [#allocation4], %s157
        %s159 = sand.u32 %s89, 1
        %s160 = smul.addr %s159, 8
        %s161 = scalar_lea.vmem [#allocation5], %s160
        %p163 = scmp.eq.s32.totalorder %s18, 0
        %v164 = vld [vmem:[%s0] sm:$0xff]
        %v165 = vld [vmem:[#allocation2] sm:$0xff]
        %v166 = vmul.f32 %v164, %v164
        %vm167 = vcmask 261120
        %v168 = vsel %vm167, %v166, 0.0
        %169 = vadd.xlane.f32.xlu0 %v168
        %v170 = vpop.xlane.xlu0 %169
        %v171 = vmax.f32 %v170, 1e-24
        %v172 = vrsqrt.pop %v171
        %v173 = vmul.f32 %v164, %v172
        %v174 = vmul.f32 %v165, %v165
        %v175 = vsel %vm167, %v174, 0.0
        %176 = vadd.xlane.f32.xlu0 %v175
        %v177 = vpop.xlane.xlu0 %176
        %v178 = vmax.f32 %v177, 1e-24
        %v179 = vrsqrt.pop %v178
        %v180 = vmul.f32 %v165, %v179
        %s181 = scalar_select %p163, 1, 0
        %v182 = vstv %s181
        %vm183 = vcmp.eq.s32.totalorder %v182, 1
        %v184 = vsel %vm183, %v173, %v180
        %v185 = vpack.c.bf16 %v173, %v173
        %v186 = vpack.c.bf16 %v180, %v180
        %v187 = vpack.c.bf16 %v184, %v184
        %v189 = vsel %vm167, %v187, 0
        %v192 = vsel %vm167, %v185, 0
        %194 = vmatprep.subr.bf16.mxu0 0
        %195 = vmatpush1.bf16.xpose.msra.mxu0 %v192
        %196 = vmatprep.subr.bf16.mxu0 0
        %197 = vmatpush1.bf16.xpose.msra.mxu0 0
        %198 = vmatprep.subr.bf16.mxu0 0
        %199 = vmatpush1.bf16.xpose.msra.mxu0 0
        %200 = vmatprep.subr.bf16.mxu0 0
        %201 = vmatpush1.bf16.xpose.msra.mxu0 0
        %202 = vmatprep.subr.bf16.mxu0 0
        %203 = vmatpush1.bf16.xpose.msra.mxu0 0
        %204 = vmatprep.subr.bf16.mxu0 0
        %205 = vmatpush1.bf16.xpose.msra.mxu0 0
        %206 = vmatprep.subr.bf16.mxu0 0
        %207 = vmatpush1.bf16.xpose.msra.mxu0 0
        %208 = vmatprep.subr.bf16.mxu0 0
        %209 = vmatpush1.bf16.xpose.msra.mxu0 0
        %210 = vmatprep.subr.bf16.mxu0 0
        %211 = vmatpush1.bf16.xpose.msra.mxu0 0
        %212 = vmatprep.subr.bf16.mxu0 0
        %213 = vmatpush1.bf16.xpose.msra.mxu0 0
        %214 = vmatprep.subr.bf16.mxu0 0
        %215 = vmatpush1.bf16.xpose.msra.mxu0 0
        %216 = vmatprep.subr.bf16.mxu0 0
        %217 = vmatpush1.bf16.xpose.msra.mxu0 0
        %218 = vmatprep.subr.bf16.mxu0 0
        %219 = vmatpush1.bf16.xpose.msra.mxu0 0
        %220 = vmatprep.subr.bf16.mxu0 0
        %221 = vmatpush1.bf16.xpose.msra.mxu0 0
        %222 = vmatprep.subr.bf16.mxu0 0
        %223 = vmatpush1.bf16.xpose.msra.mxu0 0
        %224 = vmatprep.subr.bf16.mxu0 0
        %225 = vmatpush1.bf16.xpose.msra.mxu0 0
        %226 = vmatprep.mubr.bf16.mxu0 0
        %227 = vmatmul.mubr.bf16.gmra.mrb[0].mxu0 %v189
        %v228 = vpop.f32.mrb[0].mxu0
        %v229 = vadd.f32 0.0, %v228
        %v230 = vpop.f32.mrb[0].mxu0
        %v231 = vpop.f32.mrb[0].mxu0
        %v232 = vpop.f32.mrb[0].mxu0
        %233 = vdwg.mxu0
        %v234 = vmul.f32 %v229, 10.0
        %v236 = vsel %vm167, %v186, 0
        %238 = vmatprep.subr.bf16.mxu0 0
        %239 = vmatpush1.bf16.xpose.msra.mxu0 %v236
        %240 = vmatprep.subr.bf16.mxu0 0
        %241 = vmatpush1.bf16.xpose.msra.mxu0 0
        %242 = vmatprep.subr.bf16.mxu0 0
        %243 = vmatpush1.bf16.xpose.msra.mxu0 0
        %244 = vmatprep.subr.bf16.mxu0 0
        %245 = vmatpush1.bf16.xpose.msra.mxu0 0
        %246 = vmatprep.subr.bf16.mxu0 0
        %247 = vmatpush1.bf16.xpose.msra.mxu0 0
        %248 = vmatprep.subr.bf16.mxu0 0
        %249 = vmatpush1.bf16.xpose.msra.mxu0 0
        %250 = vmatprep.subr.bf16.mxu0 0
        %251 = vmatpush1.bf16.xpose.msra.mxu0 0
        %252 = vmatprep.subr.bf16.mxu0 0
        %253 = vmatpush1.bf16.xpose.msra.mxu0 0
        %254 = vmatprep.subr.bf16.mxu0 0
        %255 = vmatpush1.bf16.xpose.msra.mxu0 0
        %256 = vmatprep.subr.bf16.mxu0 0
        %257 = vmatpush1.bf16.xpose.msra.mxu0 0
        %258 = vmatprep.subr.bf16.mxu0 0
        %259 = vmatpush1.bf16.xpose.msra.mxu0 0
        %260 = vmatprep.subr.bf16.mxu0 0
        %261 = vmatpush1.bf16.xpose.msra.mxu0 0
        %262 = vmatprep.subr.bf16.mxu0 0
        %263 = vmatpush1.bf16.xpose.msra.mxu0 0
        %264 = vmatprep.subr.bf16.mxu0 0
        %265 = vmatpush1.bf16.xpose.msra.mxu0 0
        %266 = vmatprep.subr.bf16.mxu0 0
        %267 = vmatpush1.bf16.xpose.msra.mxu0 0
        %268 = vmatprep.subr.bf16.mxu0 0
        %269 = vmatpush1.bf16.xpose.msra.mxu0 0
        %270 = vmatprep.mubr.bf16.mxu0 0
        %271 = vmatmul.mubr.bf16.gmra.mrb[0].mxu0 %v189
        %v272 = vpop.f32.mrb[0].mxu0
        %v273 = vadd.f32 0.0, %v272
        %v274 = vpop.f32.mrb[0].mxu0
        %v275 = vpop.f32.mrb[0].mxu0
        %v276 = vpop.f32.mrb[0].mxu0
        %277 = vdwg.mxu0
        %v278 = vmul.f32 %v273, 10.0
        %v279 = vlaneseq
        %v280 = vshrl.u32 %v279, 7
        %v281 = vlaneseq
        %v282 = vand.u32 %v281, 127
        %vm283 = vcmp.eq.s32.totalorder %v280, %v282
        %vm284 = vmand %vm283, %vm183
        %p285 = scmp.ne.s32.totalorder %s18, 0
        %s286 = scalar_select %p285, 1, 0
        %v287 = vstv %s286
        %vm288 = vcmp.eq.s32.totalorder %v287, 1
        %vm289 = vmand %vm283, %vm288
        %v290 = vsel %vm284, -1e+30, %v234
        %vm291 = vcmask 64512
        %v292 = vsel %vm291, %v290, -inf
        %293 = vmax.xlane.f32.xlu0 %v292
        %v294 = vpop.xlane.xlu0 %293
        %v295 = vsel %vm289, -1e+30, %v278
        %v296 = vsel %vm291, %v295, -inf
        %297 = vmax.xlane.f32.xlu0 %v296
        %v298 = vpop.xlane.xlu0 %297
        %v299 = vmax.f32 %v294, %v298
        %v300 = vsub.f32 %v234, %v299
        %v301 = vmul.f32 %v300, 1.442695
        %v302 = vpow.pop %v301
        %v303 = vsel %vm284, 0.0, %v302
        %v304 = vsub.f32 %v278, %v299
        %v305 = vmul.f32 %v304, 1.442695
        %v306 = vpow.pop %v305
        %v307 = vsel %vm289, 0.0, %v306
        %v308 = vsel %vm291, %v303, 0.0
        %309 = vadd.xlane.f32.xlu0 %v308
        %v310 = vpop.xlane.xlu0 %309
        %v311 = vsel %vm291, %v307, 0.0
        %312 = vadd.xlane.f32.xlu0 %v311
        %v313 = vpop.xlane.xlu0 %312
        %v314 = vadd.f32 %v310, %v313
        %v315 = vlog2.pop %v314
        %v316 = vmul.f32 %v315, 0.6931472
        %v317 = vadd.f32 %v299, %v316
        %v318 = vld [vmem:[%s2] sm:$0xff]
        %vm319 = vcmask 31744
        %v321 = vsel %vm319, %v318, 0
        %323 = vmatprep.subr.mxu0 0.0
        %324 = vmatpush1.xpose.msra.mxu0 %v321
        %325 = vmatprep.subr.mxu0 0.0
        %326 = vmatpush1.xpose.msra.mxu0 0.0
        %327 = vmatprep.subr.mxu0 0.0
        %328 = vmatpush1.xpose.msra.mxu0 0.0
        %329 = vmatprep.subr.mxu0 0.0
        %330 = vmatpush1.xpose.msra.mxu0 0.0
        %331 = vmatprep.subr.mxu0 0.0
        %332 = vmatpush1.xpose.msra.mxu0 0.0
        %333 = vmatprep.subr.mxu0 0.0
        %334 = vmatpush1.xpose.msra.mxu0 0.0
        %335 = vmatprep.subr.mxu0 0.0
        %336 = vmatpush1.xpose.msra.mxu0 0.0
        %337 = vmatprep.subr.mxu0 0.0
        %338 = vmatpush1.xpose.msra.mxu0 0.0
        %339 = vmatprep.subr.mxu0 0.0
        %340 = vmatpush1.xpose.msra.mxu0 0.0
        %341 = vmatprep.subr.mxu0 0.0
        %342 = vmatpush1.xpose.msra.mxu0 0.0
        %343 = vmatprep.subr.mxu0 0.0
        %344 = vmatpush1.xpose.msra.mxu0 0.0
        %345 = vmatprep.subr.mxu0 0.0
        %346 = vmatpush1.xpose.msra.mxu0 0.0
        %347 = vmatprep.subr.mxu0 0.0
        %348 = vmatpush1.xpose.msra.mxu0 0.0
        %349 = vmatprep.subr.mxu0 0.0
        %350 = vmatpush1.xpose.msra.mxu0 0.0
        %351 = vmatprep.subr.mxu0 0.0
        %352 = vmatpush1.xpose.msra.mxu0 0.0
        %353 = vmatprep.subr.mxu0 0.0
        %354 = vmatpush1.xpose.msra.mxu0 0.0
        %355 = vmatprep.subr.mxu0 0.0
        %356 = vmatpush1.xpose.msra.mxu0 0.0
        %357 = vmatprep.subr.mxu0 0.0
        %358 = vmatpush1.xpose.msra.mxu0 0.0
        %359 = vmatprep.subr.mxu0 0.0
        %360 = vmatpush1.xpose.msra.mxu0 0.0
        %361 = vmatprep.subr.mxu0 0.0
        %362 = vmatpush1.xpose.msra.mxu0 0.0
        %363 = vmatprep.subr.mxu0 0.0
        %364 = vmatpush1.xpose.msra.mxu0 0.0
        %365 = vmatprep.subr.mxu0 0.0
        %366 = vmatpush1.xpose.msra.mxu0 0.0
        %367 = vmatprep.subr.mxu0 0.0
        %368 = vmatpush1.xpose.msra.mxu0 0.0
        %369 = vmatprep.subr.mxu0 0.0
        %370 = vmatpush1.xpose.msra.mxu0 0.0
        %371 = vmatprep.subr.mxu0 0.0
        %372 = vmatpush1.xpose.msra.mxu0 0.0
        %373 = vmatprep.subr.mxu0 0.0
        %374 = vmatpush1.xpose.msra.mxu0 0.0
        %375 = vmatprep.subr.mxu0 0.0
        %376 = vmatpush1.xpose.msra.mxu0 0.0
        %377 = vmatprep.subr.mxu0 0.0
        %378 = vmatpush1.xpose.msra.mxu0 0.0
        %379 = vmatprep.subr.mxu0 0.0
        %380 = vmatpush1.xpose.msra.mxu0 0.0
        %381 = vmatprep.subr.mxu0 0.0
        %382 = vmatpush1.xpose.msra.mxu0 0.0
        %383 = vmatprep.subr.mxu0 0.0
        %384 = vmatpush1.xpose.msra.mxu0 0.0
        %385 = vmatprep.subr.mxu0 0.0
        %386 = vmatpush1.xpose.msra.mxu0 0.0
        %387 = vmatprep.mubr.f32.mxu0 0.0
        %388 = vmatmul.mubr.f32.gmra.mrb[0].mxu0 %v321
        %v389 = vpop.f32.mrb[0].mxu0
        %v390 = vadd.f32 0.0, %v389
        %v391 = vpop.f32.mrb[0].mxu0
        %392 = vdwg.mxu0
        %v393 = vsel %vm283, %v390, 0.0
        %v394 = vsel %vm291, %v393, 0.0
        %395 = vadd.xlane.f32.xlu0 %v394
        %v396 = vpop.xlane.xlu0 %395
        %v397 = vrot.slane %v394, 4
        %v398 = vadd.f32 %v394, %v397
        %v399 = vrot.slane %v398, 2
        %v400 = vadd.f32 %v398, %v399
        %v401 = vrot.slane %v400, 1
        %v402 = vadd.f32 %v400, %v401
        %v403 = vadd.f32 %v396, %v402
        %v404 = vmul.f32 %v390, 2.0
        %v405 = vsub.f32 %v403, %v404
        %v406 = vmax.f32 %v405, 0.0
        %v407 = vmul.f32 %v406, -0.5
        %v408 = vmul.f32 %v407, 1.442695
        %v409 = vpow.pop %v408
        %v410 = vsel %vm291, %v409, 0.0
        %v411 = vrot.slane %v410, 4
        %v412 = vadd.f32 %v410, %v411
        %v413 = vrot.slane %v412, 2
        %v414 = vadd.f32 %v412, %v413
        %v415 = vrot.slane %v414, 1
        %v416 = vadd.f32 %v414, %v415
        %v417 = vmul.f32 %v416, 2.0
        %v418 = vsub.f32 %v417, 1.0
        %v419 = vrcp.pop %v418
        %v420 = vmul.f32 1.0, %v419
        %v421 = vmul.f32 %v409, %v420
        %v422 = vsub.f32 %v234, %v317
        %v423 = vsel %vm284, 0.0, %v422
        %v424 = vsub.f32 %v278, %v317
        %v425 = vsel %vm289, 0.0, %v424
        %v426 = vadd.f32 %v423, %v425
        %v427 = vmul.f32 %v421, %v426
        %v428 = vsel %vm291, %v427, 0.0
        %429 = vadd.xlane.f32.xlu0 %v428
        %v430 = vpop.xlane.xlu0 %429
        %v431 = vrot.slane %v430, 4
        %v432 = vadd.f32 %v430, %v431
        %v433 = vrot.slane %v432, 2
        %v434 = vadd.f32 %v432, %v433
        %v435 = vrot.slane %v434, 1
        %v436 = vadd.f32 %v434, %v435
        %s437 = vtos %v436
        %s438 = smul.f32 %s437, -0.125
        %v439 = vstv %s438
        %v440 = vadd.f32 %v439, 0.0
        %441 = vst [vmem:[%s161] sm:$0xff] %v440
        %s442 = sand.u32 %s89, 1
        %s443 = scalar_lea.sflag [#allocation4], %s442
        %s444 = sand.u32 %s89, 1
        %s445 = smul.addr %s444, 8
        %s446 = scalar_lea.vmem [#allocation5], %s445
        // Predicated region
        $region37: #{tpu_custom_call.1} parent=31 // pred_check
          %p447 = pneg %p99
        $region38: #{tpu_custom_call.1} parent=31 // pred_check_branch
          %449 = sbr.rel (%p447) target = $region40
        $region39: #{tpu_custom_call.1} parent=31 // pred_region
          %s451 = ssub.s32 128, 128
          %452 = vsyncadd %s443, %s451
          %s453 = smul.addr %s18, 128
          %s454 = scalar_lea.hbm %s3, %s453
          %s456 = sshll.u32 %s446, 4
          %s457 = int_to_ptr.vmem [resolvable:$true] %s456
          %459 = dma.vmem_to_hbm [thread:$0]  %s457, 128, %s454, %s443
        $region40: #{tpu_custom_call.1} parent=31 // pred_fallthru
          _
      $region32: #{tpu_custom_call.1} parent=5 // pred_fallthru
        _
      %p460 = scmp.le.s32.totalorder 2, %s13
      // Predicated region
      $region41: #{tpu_custom_call.1} parent=5 // pred_check
        %p461 = pneg %p460
      $region42: #{tpu_custom_call.1} parent=5 // pred_check_branch
        %463 = sbr.rel (%p461) target = $region44
      $region43: #{tpu_custom_call.1} parent=5 // pred_region
        %s464 = ssub.s32 %s13, 2
        // Predicated region
        $region45: #{tpu_custom_call.1} parent=43 // pred_check
          %p465 = pneg %p105
        $region46: #{tpu_custom_call.1} parent=43 // pred_check_branch
          %467 = sbr.rel (%p465) target = $region48
        $region47: #{tpu_custom_call.1} parent=43 // pred_region
          %s468 = sand.u32 %s90, 1
          %s469 = scalar_lea.sflag [#allocation4], %s468
          %s470 = sand.u32 %s90, 1
          %s471 = smul.addr %s470, 8
          %s472 = scalar_lea.vmem [#allocation5], %s471
          %473 = dma.done %s469, 128
        $region48: #{tpu_custom_call.1} parent=43 // pred_fallthru
          _
      $region44: #{tpu_custom_call.1} parent=5 // pred_fallthru
        _
    $region6: #{tpu_custom_call.1} parent=1 // loop_footer
      %s17 = sadd.s32 1, %s13
    $region7: #{tpu_custom_call.1} parent=1 // loop_footer_branch
      %12 = sbr.rel target = $region3
    $region8: #{tpu_custom_call.1} parent=1 // loop_exit
      _
    %474 = vsyncpa [#allocation3], 1
    %s475 = scalar_lea.sflag [#allocation3], 1
    %476 = vsyncpa %s475, 1
    %477 = vsyncpa [#allocation4], 1
    %s478 = scalar_lea.sflag [#allocation4], 1
    %479 = vsyncpa %s478, 1

</llo_original>
